<compile_context>
chip_gen: v5e
topology: v5e:2x2
jax: 0.10.0
libtpu: 0.0.40
codegen_flags: <defaults>
</compile_context>

<pallas_src>
import jax
import jax.numpy as jnp
from jax import lax
from jax.experimental import pallas as pl
from jax.experimental.pallas import tpu as pltpu

HIDDEN = (18, 54, 12)
LANE = 128


def _round_up(v, m):
    return ((v + m - 1) // m) * m


def _deepnn_kernel(x_ref,
                   w1t_ref, b1t_ref,
                   w2t_ref, b2t_ref,
                   w3t_ref, b3t_ref,
                   w4t_ref, b4t_ref,
                   o_ref):
    """Fused 4-layer MLP + softmax on one batch tile, computed transposed.

    x_ref : (TB, in_dim) f32     -- batch rows streamed from HBM
    wNt   : (out_N, in_N) bf16   -- transposed weights, VMEM-resident
    bNt   : (out_N, 1)    f32    -- transposed biases,  VMEM-resident
    o_ref : (out_dim, TB) f32    -- softmax probabilities, transposed
    """
    xb = x_ref[...].astype(jnp.bfloat16)   # in-register cast (VPU, free slot)

    # Layer 1: contract the shared `in` axis of W1^T (h1,in) and x (TB,in),
    # i.e. W1^T @ x^T on the MXU without materializing x^T.
    h = lax.dot_general(w1t_ref[...], xb, (((1,), (1,)), ((), ())),
                        preferred_element_type=jnp.float32) + b1t_ref[...]
    h = jnp.maximum(h, 0.0)                                    # (18, TB) f32

    def layer(h_f32, wt_ref, bt_ref):
        # bf16 x bf16 MXU matmul, f32 accumulation, f32 bias add.
        return jnp.dot(wt_ref[...], h_f32.astype(jnp.bfloat16),
                       preferred_element_type=jnp.float32) + bt_ref[...]

    h = jnp.maximum(layer(h, w2t_ref, b2t_ref), 0.0)           # (54, TB)
    h = jnp.maximum(layer(h, w3t_ref, b3t_ref), 0.0)           # (12, TB)
    logits = layer(h, w4t_ref, b4t_ref)                        # (out_dim, TB)

    # Numerically stable softmax over the feature (sublane) axis: max/sum hit
    # the XLU, exp hits the EUP, both otherwise idle here.  Exact divide so
    # every output column sums to 1 (the approx reciprocal did not).
    m = jnp.max(logits, axis=0, keepdims=True)
    e = jnp.exp(logits - m)
    denom = jnp.sum(e, axis=0, keepdims=True)
    o_ref[...] = (e / denom).astype(o_ref.dtype)


def prepare_params(params):
    """One-time layout/dtype prep (do this once, outside the hot path):
    W^T as (out, in) bf16 for the MXU, b^T as (out, 1) f32."""
    prepped = {}
    for i in range(1, 5):
        prepped[f"wt{i}"] = params[f"w{i}"].T.astype(jnp.bfloat16)
        prepped[f"bt{i}"] = params[f"b{i}"].T.astype(jnp.float32)
    return prepped


def deepnn_forward(x, prepped, *, block_batch=4096):
    """x: (B, input_dim) float32. prepped: output of prepare_params()."""
    B, in_dim = x.shape
    out_dim = prepped["wt4"].shape[0]

    block_batch = max(LANE, _round_up(block_batch, LANE))
    if B >= 2 * LANE:
        # Lane-aligned batch tiles, capped both by block_batch and by ~B/2 so
        # the grid always has >= 2 steps (lets dimension_semantics="parallel"
        # actually shard work across both v7x TensorCores; harmless on
        # v5e/v6e).  Last tile may be partial -- Pallas masks the write-back.
        tb = min(block_batch, _round_up(pl.cdiv(B, 2), LANE))
    else:
        # Tiny batch: a single full-array block (exempt from the (8,128)
        # divisibility rule), no padding anywhere.
        tb = B
    grid = (pl.cdiv(B, tb),)

    resident = lambda a: pl.BlockSpec(a.shape, lambda i: (0, 0))

    out_t = pl.pallas_call(
        _deepnn_kernel,
        out_shape=jax.ShapeDtypeStruct((out_dim, B), jnp.float32),
        grid=grid,
        in_specs=[
            pl.BlockSpec((tb, in_dim), lambda i: (i, 0)),   # stream x rows (f32)
            resident(prepped["wt1"]), resident(prepped["bt1"]),
            resident(prepped["wt2"]), resident(prepped["bt2"]),
            resident(prepped["wt3"]), resident(prepped["bt3"]),
            resident(prepped["wt4"]), resident(prepped["bt4"]),
        ],
        out_specs=pl.BlockSpec((out_dim, tb), lambda i: (0, i)),
        compiler_params=pltpu.CompilerParams(
            dimension_semantics=("parallel",)),
    )(x,
      prepped["wt1"], prepped["bt1"], prepped["wt2"], prepped["bt2"],
      prepped["wt3"], prepped["bt3"], prepped["wt4"], prepped["bt4"])

    # (out_dim, B) -> (B, out_dim): a tiny (16 B/row) pass, vs the previous
    # 512 B/row padded-output slice.
    return out_t.T


def init_params(key, input_dim, output_dim):
    """Deterministic synthetic parameters (PyTorch Linear-style uniform init).
    Stored as (in, out) weights and (1, out) biases."""
    dims = (input_dim,) + HIDDEN + (output_dim,)
    params = {}
    for i in range(4):
        fan_in, fan_out = dims[i], dims[i + 1]
        key, kw, kb = jax.random.split(key, 3)
        bound = 1.0 / (fan_in ** 0.5)
        params[f"w{i+1}"] = jax.random.uniform(
            kw, (fan_in, fan_out), jnp.float32, -bound, bound)
        params[f"b{i+1}"] = jax.random.uniform(
            kb, (1, fan_out), jnp.float32, -bound, bound)
    return params


def deepnn_reference(x, params):
    """Pure-JAX reference using the same mixed-precision policy as the kernel
    (bf16 matmul operands, f32 accumulation / elementwise / softmax)."""
    h = x.astype(jnp.bfloat16)
    logits = None
    for i in range(1, 5):
        w = params[f"w{i}"].astype(jnp.bfloat16)
        y = jnp.dot(h, w, preferred_element_type=jnp.float32) + params[f"b{i}"]
        if i < 4:
            h = jnp.maximum(y, 0.0).astype(jnp.bfloat16)
        else:
            logits = y
    return jax.nn.softmax(logits, axis=1)


if __name__ == "__main__":
    input_dim = 16   # StandardScaler'd feature count (synthetic)
    output_dim = 4   # number of classes (synthetic)
    batch = 8

    key = jax.random.PRNGKey(0)
    key, kx, kp = jax.random.split(key, 3)
    x = jax.random.normal(kx, (batch, input_dim), dtype=jnp.float32)
    params = init_params(kp, input_dim, output_dim)
    prepped = prepare_params(params)

    # Small-batch path (single full-array block).
    out = jax.block_until_ready(deepnn_forward(x, prepped))
    ref = deepnn_reference(x, params)
    assert out.shape == (batch, output_dim), out.shape
    assert jnp.allclose(out, ref, atol=1e-3, rtol=1e-3), "mismatch vs reference"
    assert jnp.allclose(jnp.sum(out, axis=1), 1.0, atol=1e-4), "rows must sum to 1"

    # Multi-tile path: >= 2 grid steps + ragged (masked) last tile.
    x2 = jax.random.normal(key, (300, input_dim), dtype=jnp.float32)
    out2 = jax.block_until_ready(deepnn_forward(x2, prepped))
    ref2 = deepnn_reference(x2, params)
    assert out2.shape == (300, output_dim), out2.shape
    assert jnp.allclose(out2, ref2, atol=1e-3, rtol=1e-3), "mismatch vs reference (multi-tile)"
    assert jnp.allclose(jnp.sum(out2, axis=1), 1.0, atol=1e-4), "rows must sum to 1 (multi-tile)"

    print("KERNEL_OK")
</pallas_src>

<mosaic_0001>
module attributes {stable_mosaic.version = 11 : i64} {
  func.func @_deepnn_kernel(%arg0: i32, %arg1: memref<8x16xf32, #tpu.memory_space<vmem>>, %arg2: memref<18x16xbf16, #tpu.memory_space<vmem>>, %arg3: memref<18x1xf32, #tpu.memory_space<vmem>>, %arg4: memref<54x18xbf16, #tpu.memory_space<vmem>>, %arg5: memref<54x1xf32, #tpu.memory_space<vmem>>, %arg6: memref<12x54xbf16, #tpu.memory_space<vmem>>, %arg7: memref<12x1xf32, #tpu.memory_space<vmem>>, %arg8: memref<4x12xbf16, #tpu.memory_space<vmem>>, %arg9: memref<4x1xf32, #tpu.memory_space<vmem>>, %arg10: memref<4x8xf32, #tpu.memory_space<vmem>>) attributes {dimension_semantics = [#tpu.dimension_semantics<parallel>], iteration_bounds = array<i64: 1>, scalar_prefetch = 0 : i64, scratch_operands = 0 : i64, tpu.core_type = #tpu.core_type<tc>, window_params = [{transform_indices = @transform_0, window_bounds = array<i64: 8, 16>}, {pipeline_mode = #tpu.pipeline_mode<synchronous>, transform_indices = @transform_1, window_bounds = array<i64: 18, 16>}, {pipeline_mode = #tpu.pipeline_mode<synchronous>, transform_indices = @transform_2, window_bounds = array<i64: 18, 1>}, {pipeline_mode = #tpu.pipeline_mode<synchronous>, transform_indices = @transform_3, window_bounds = array<i64: 54, 18>}, {pipeline_mode = #tpu.pipeline_mode<synchronous>, transform_indices = @transform_4, window_bounds = array<i64: 54, 1>}, {pipeline_mode = #tpu.pipeline_mode<synchronous>, transform_indices = @transform_5, window_bounds = array<i64: 12, 54>}, {pipeline_mode = #tpu.pipeline_mode<synchronous>, transform_indices = @transform_6, window_bounds = array<i64: 12, 1>}, {pipeline_mode = #tpu.pipeline_mode<synchronous>, transform_indices = @transform_7, window_bounds = array<i64: 4, 12>}, {pipeline_mode = #tpu.pipeline_mode<synchronous>, transform_indices = @transform_8, window_bounds = array<i64: 4, 1>}, {transform_indices = @transform_9, window_bounds = array<i64: 4, 8>}]} {
    %c0 = arith.constant 0 : index
    %c0_0 = arith.constant 0 : index
    %0 = vector.load %arg1[%c0, %c0_0] : memref<8x16xf32, #tpu.memory_space<vmem>>, vector<8x16xf32>
    %1 = arith.truncf %0 : vector<8x16xf32> to vector<8x16xbf16>
    %c0_1 = arith.constant 0 : index
    %c0_2 = arith.constant 0 : index
    %2 = vector.load %arg2[%c0_1, %c0_2] : memref<18x16xbf16, #tpu.memory_space<vmem>>, vector<18x16xbf16>
    %cst = arith.constant dense<0.000000e+00> : vector<18x8xf32>
    %3 = tpu.matmul %2, %1, %cst {dimension_numbers = #tpu.dot_dimension_numbers<[1], [1], [0], [0], [0, 0, 1, 0], [], []>} : vector<18x16xbf16>, vector<8x16xbf16>, vector<18x8xf32> -> vector<18x8xf32>
    %c0_3 = arith.constant 0 : index
    %c0_4 = arith.constant 0 : index
    %4 = vector.load %arg3[%c0_3, %c0_4] : memref<18x1xf32, #tpu.memory_space<vmem>>, vector<18x1xf32>
    %5 = vector.broadcast %4 : vector<18x1xf32> to vector<18x8xf32>
    %6 = arith.addf %3, %5 : vector<18x8xf32>
    %cst_5 = arith.constant 0.000000e+00 : f32
    %7 = vector.broadcast %cst_5 : f32 to vector<18x8xf32>
    %8 = arith.maximumf %6, %7 : vector<18x8xf32>
    %c0_6 = arith.constant 0 : index
    %c0_7 = arith.constant 0 : index
    %9 = vector.load %arg4[%c0_6, %c0_7] : memref<54x18xbf16, #tpu.memory_space<vmem>>, vector<54x18xbf16>
    %10 = arith.truncf %8 : vector<18x8xf32> to vector<18x8xbf16>
    %cst_8 = arith.constant dense<0.000000e+00> : vector<54x8xf32>
    %11 = tpu.matmul %9, %10, %cst_8 {dimension_numbers = #tpu.dot_dimension_numbers<[1], [0], [0], [1], [0, 0, 1, 1], [], []>} : vector<54x18xbf16>, vector<18x8xbf16>, vector<54x8xf32> -> vector<54x8xf32>
    %c0_9 = arith.constant 0 : index
    %c0_10 = arith.constant 0 : index
    %12 = vector.load %arg5[%c0_9, %c0_10] : memref<54x1xf32, #tpu.memory_space<vmem>>, vector<54x1xf32>
    %13 = vector.broadcast %12 : vector<54x1xf32> to vector<54x8xf32>
    %14 = arith.addf %11, %13 : vector<54x8xf32>
    %cst_11 = arith.constant 0.000000e+00 : f32
    %15 = vector.broadcast %cst_11 : f32 to vector<54x8xf32>
    %16 = arith.maximumf %14, %15 : vector<54x8xf32>
    %c0_12 = arith.constant 0 : index
    %c0_13 = arith.constant 0 : index
    %17 = vector.load %arg6[%c0_12, %c0_13] : memref<12x54xbf16, #tpu.memory_space<vmem>>, vector<12x54xbf16>
    %18 = arith.truncf %16 : vector<54x8xf32> to vector<54x8xbf16>
    %cst_14 = arith.constant dense<0.000000e+00> : vector<12x8xf32>
    %19 = tpu.matmul %17, %18, %cst_14 {dimension_numbers = #tpu.dot_dimension_numbers<[1], [0], [0], [1], [0, 0, 1, 1], [], []>} : vector<12x54xbf16>, vector<54x8xbf16>, vector<12x8xf32> -> vector<12x8xf32>
    %c0_15 = arith.constant 0 : index
    %c0_16 = arith.constant 0 : index
    %20 = vector.load %arg7[%c0_15, %c0_16] : memref<12x1xf32, #tpu.memory_space<vmem>>, vector<12x1xf32>
    %21 = vector.broadcast %20 : vector<12x1xf32> to vector<12x8xf32>
    %22 = arith.addf %19, %21 : vector<12x8xf32>
    %cst_17 = arith.constant 0.000000e+00 : f32
    %23 = vector.broadcast %cst_17 : f32 to vector<12x8xf32>
    %24 = arith.maximumf %22, %23 : vector<12x8xf32>
    %c0_18 = arith.constant 0 : index
    %c0_19 = arith.constant 0 : index
    %25 = vector.load %arg8[%c0_18, %c0_19] : memref<4x12xbf16, #tpu.memory_space<vmem>>, vector<4x12xbf16>
    %26 = arith.truncf %24 : vector<12x8xf32> to vector<12x8xbf16>
    %cst_20 = arith.constant dense<0.000000e+00> : vector<4x8xf32>
    %27 = tpu.matmul %25, %26, %cst_20 {dimension_numbers = #tpu.dot_dimension_numbers<[1], [0], [0], [1], [0, 0, 1, 1], [], []>} : vector<4x12xbf16>, vector<12x8xbf16>, vector<4x8xf32> -> vector<4x8xf32>
    %c0_21 = arith.constant 0 : index
    %c0_22 = arith.constant 0 : index
    %28 = vector.load %arg9[%c0_21, %c0_22] : memref<4x1xf32, #tpu.memory_space<vmem>>, vector<4x1xf32>
    %29 = vector.broadcast %28 : vector<4x1xf32> to vector<4x8xf32>
    %30 = arith.addf %27, %29 : vector<4x8xf32>
    %cst_23 = arith.constant dense<0xFF800000> : vector<8xf32>
    %31 = vector.multi_reduction <maximumf>, %30, %cst_23 [0] : vector<4x8xf32> to vector<8xf32>
    %32 = vector.shape_cast %31 : vector<8xf32> to vector<1x8xf32>
    %33 = vector.broadcast %32 : vector<1x8xf32> to vector<4x8xf32>
    %34 = arith.subf %30, %33 : vector<4x8xf32>
    %35 = math.exp %34 : vector<4x8xf32>
    %cst_24 = arith.constant dense<0.000000e+00> : vector<8xf32>
    %36 = vector.multi_reduction <add>, %35, %cst_24 [0] : vector<4x8xf32> to vector<8xf32>
    %37 = vector.shape_cast %36 : vector<8xf32> to vector<1x8xf32>
    %38 = vector.broadcast %37 : vector<1x8xf32> to vector<4x8xf32>
    %39 = arith.divf %35, %38 : vector<4x8xf32>
    %c0_25 = arith.constant 0 : index
    %c0_26 = arith.constant 0 : index
    %40 = vector.load %arg10[%c0_25, %c0_26] : memref<4x8xf32, #tpu.memory_space<vmem>>, vector<4x8xf32>
    tpu.vector_store %arg10[%c0_25, %c0_26], %39 {strides = array<i32>} : memref<4x8xf32, #tpu.memory_space<vmem>>, vector<4x8xf32>,
    return
  }
  func.func @transform_0(%arg0: i32) -> (i32, i32) {
    %c0_i32 = arith.constant 0 : i32
    %c0_i32_0 = arith.constant 0 : i32
    return %arg0, %c0_i32 : i32, i32
  }
  func.func @transform_1(%arg0: i32) -> (i32, i32) {
    %c0_i32 = arith.constant 0 : i32
    %c0_i32_0 = arith.constant 0 : i32
    %c0_i32_1 = arith.constant 0 : i32
    return %c0_i32, %c0_i32_0 : i32, i32
  }
  func.func @transform_2(%arg0: i32) -> (i32, i32) {
    %c0_i32 = arith.constant 0 : i32
    %c0_i32_0 = arith.constant 0 : i32
    %c0_i32_1 = arith.constant 0 : i32
    return %c0_i32, %c0_i32_0 : i32, i32
  }
  func.func @transform_3(%arg0: i32) -> (i32, i32) {
    %c0_i32 = arith.constant 0 : i32
    %c0_i32_0 = arith.constant 0 : i32
    %c0_i32_1 = arith.constant 0 : i32
    return %c0_i32, %c0_i32_0 : i32, i32
  }
  func.func @transform_4(%arg0: i32) -> (i32, i32) {
    %c0_i32 = arith.constant 0 : i32
    %c0_i32_0 = arith.constant 0 : i32
    %c0_i32_1 = arith.constant 0 : i32
    return %c0_i32, %c0_i32_0 : i32, i32
  }
  func.func @transform_5(%arg0: i32) -> (i32, i32) {
    %c0_i32 = arith.constant 0 : i32
    %c0_i32_0 = arith.constant 0 : i32
    %c0_i32_1 = arith.constant 0 : i32
    return %c0_i32, %c0_i32_0 : i32, i32
  }
  func.func @transform_6(%arg0: i32) -> (i32, i32) {
    %c0_i32 = arith.constant 0 : i32
    %c0_i32_0 = arith.constant 0 : i32
    %c0_i32_1 = arith.constant 0 : i32
    return %c0_i32, %c0_i32_0 : i32, i32
  }
  func.func @transform_7(%arg0: i32) -> (i32, i32) {
    %c0_i32 = arith.constant 0 : i32
    %c0_i32_0 = arith.constant 0 : i32
    %c0_i32_1 = arith.constant 0 : i32
    return %c0_i32, %c0_i32_0 : i32, i32
  }
  func.func @transform_8(%arg0: i32) -> (i32, i32) {
    %c0_i32 = arith.constant 0 : i32
    %c0_i32_0 = arith.constant 0 : i32
    %c0_i32_1 = arith.constant 0 : i32
    return %c0_i32, %c0_i32_0 : i32, i32
  }
  func.func @transform_9(%arg0: i32) -> (i32, i32) {
    %c0_i32 = arith.constant 0 : i32
    %c0_i32_0 = arith.constant 0 : i32
    return %c0_i32, %arg0 : i32, i32
  }
}

</mosaic_0001>

<llo_original>
// kernel: tpu_custom_call.1
$region0: #{tpu_custom_call.1}
  #allocation0 [shape = 'u32[]', space=smem, size = 0x4, offset = 0x4, fixed_abs, tag = 'smem constant byte address 0x4 - core index']
  #allocation1 [shape = 'u32[72,128]{1,0:T(1,128)}', space=vmem, size = 0x9000, scoped, tag = 'internal scratch']
  %s0 = inlined_call_operand.vmem [shape: f32[8,16], index: 0, kind: input, shape index: {}]
  %s1 = inlined_call_operand.vmem [shape: bf16[18,16], index: 1, kind: input, shape index: {}]
  %s2 = inlined_call_operand.vmem [shape: f32[18,1], index: 2, kind: input, shape index: {}]
  %s3 = inlined_call_operand.vmem [shape: bf16[54,18], index: 3, kind: input, shape index: {}]
  %s4 = inlined_call_operand.vmem [shape: f32[54,1], index: 4, kind: input, shape index: {}]
  %s5 = inlined_call_operand.vmem [shape: bf16[12,54], index: 5, kind: input, shape index: {}]
  %s6 = inlined_call_operand.vmem [shape: f32[12,1], index: 6, kind: input, shape index: {}]
  %s7 = inlined_call_operand.vmem [shape: bf16[4,12], index: 7, kind: input, shape index: {}]
  %s8 = inlined_call_operand.vmem [shape: f32[4,1], index: 8, kind: input, shape index: {}]
  %s9 = inlined_call_operand.hbm [shape: f32[4,8], index: 9, kind: output, shape index: {}]
  %s10 = sld [smem:[#allocation0]]
  $region46: #{tpu_custom_call.1} parent=0
    _
  %s12 = ssub.s32 1, %s10
  %s13 = scalar_select 0, %s12, %s10
  $region1: #{tpu_custom_call.1} parent=0
    #allocation2 [shape = 'u8[2048]{0}', space=vmem, size = 0x800, scoped, tag = 'output window, operand 0, single buffered']
    #allocation3 [shape = 's32[1]{0}', space=sflag, size = 0x4, scoped, tag = 'scoped memory for tpu_custom_call.1']
    %14 = vsyncpa [#allocation3], 0
    // Predicated region
    $region2: #{tpu_custom_call.1} parent=1 // pred_check
      _
    $region3: #{tpu_custom_call.1} parent=1 // pred_check_branch
      %16 = sbr.rel (0) target = $region5
    $region4: #{tpu_custom_call.1} parent=1 // pred_region
      _
    $region5: #{tpu_custom_call.1} parent=1 // pred_fallthru
      _
    // Predicated region
    $region6: #{tpu_custom_call.1} parent=1 // pred_check
      _
    $region7: #{tpu_custom_call.1} parent=1 // pred_check_branch
      %18 = sbr.rel (0) target = $region9
    $region8: #{tpu_custom_call.1} parent=1 // pred_region
      _
    $region9: #{tpu_custom_call.1} parent=1 // pred_fallthru
      _
    // Predicated region
    $region10: #{tpu_custom_call.1} parent=1 // pred_check
      _
    $region11: #{tpu_custom_call.1} parent=1 // pred_check_branch
      %20 = sbr.rel (0) target = $region13
    $region12: #{tpu_custom_call.1} parent=1 // pred_region
      _
    $region13: #{tpu_custom_call.1} parent=1 // pred_fallthru
      _
    // Predicated region
    $region14: #{tpu_custom_call.1} parent=1 // pred_check
      _
    $region15: #{tpu_custom_call.1} parent=1 // pred_check_branch
      %22 = sbr.rel (0) target = $region17
    $region16: #{tpu_custom_call.1} parent=1 // pred_region
      _
    $region17: #{tpu_custom_call.1} parent=1 // pred_fallthru
      _
    // Predicated region
    $region18: #{tpu_custom_call.1} parent=1 // pred_check
      _
    $region19: #{tpu_custom_call.1} parent=1 // pred_check_branch
      %24 = sbr.rel (0) target = $region21
    $region20: #{tpu_custom_call.1} parent=1 // pred_region
      _
    $region21: #{tpu_custom_call.1} parent=1 // pred_fallthru
      _
    // Predicated region
    $region22: #{tpu_custom_call.1} parent=1 // pred_check
      _
    $region23: #{tpu_custom_call.1} parent=1 // pred_check_branch
      %26 = sbr.rel (0) target = $region25
    $region24: #{tpu_custom_call.1} parent=1 // pred_region
      _
    $region25: #{tpu_custom_call.1} parent=1 // pred_fallthru
      _
    // Predicated region
    $region26: #{tpu_custom_call.1} parent=1 // pred_check
      _
    $region27: #{tpu_custom_call.1} parent=1 // pred_check_branch
      %28 = sbr.rel (0) target = $region29
    $region28: #{tpu_custom_call.1} parent=1 // pred_region
      _
    $region29: #{tpu_custom_call.1} parent=1 // pred_fallthru
      _
    // Predicated region
    $region30: #{tpu_custom_call.1} parent=1 // pred_check
      _
    $region31: #{tpu_custom_call.1} parent=1 // pred_check_branch
      %30 = sbr.rel (0) target = $region33
    $region32: #{tpu_custom_call.1} parent=1 // pred_region
      _
    $region33: #{tpu_custom_call.1} parent=1 // pred_fallthru
      _
    // Predicated region
    $region34: #{tpu_custom_call.1} parent=1 // pred_check
      _
    $region35: #{tpu_custom_call.1} parent=1 // pred_check_branch
      %32 = sbr.rel (0) target = $region37
    $region36: #{tpu_custom_call.1} parent=1 // pred_region
      _
    $region37: #{tpu_custom_call.1} parent=1 // pred_fallthru
      _
    %v34 = vld [vmem:[%s0] sm:$0xff]
    %v35 = vpack.c.bf16 %v34, %v34
    %v36 = vld [vmem:[%s1] sm:$0xf]
    %v37 = vld [vmem:[%s1 + $0x4] sm:$0xf]
    %v38 = vld [vmem:[%s1 + $0x8] sm:$0x1]
    %v39 = vld [vmem:[%s2] sm:$0xff]
    %v40 = vld [vmem:[%s2 + $0x8] sm:$0xff]
    %v41 = vld [vmem:[%s2 + $0x10] sm:$0x3]
    %43 = vset.pattern.permute.xlu0 0
    %44 = vperm.xlu0 %43, %v39
    %v45 = vpop.permute.xlu0 %44
    %48 = vset.pattern.permute.xlu0 0
    %49 = vperm.xlu0 %48, %v40
    %v50 = vpop.permute.xlu0 %49
    %53 = vset.pattern.permute.xlu0 0
    %54 = vperm.xlu0 %53, %v41
    %v55 = vpop.permute.xlu0 %54
    %v60 = vunpack.c.l.b16 %v36
    %v61 = vunpack.c.l.b16 %v37
    %v62 = vunpack.c.l.b16 %v38
    %v63 = vpack.c.b16 %v61, %v60
    %v64 = vpack.c.b16 %v62, %v62
    %vm65 = vcmask 130048
    %v67 = vsel %vm65, %v63, 0
    %v70 = vsel %vm65, %v64, 0
    %v73 = vsel %vm65, %v35, 0
    %75 = vmatpush.bf16.xpose.msra.mxu0 0
    %76 = vmatpush.bf16.xpose.msra.mxu0 0
    %77 = vmatpush.bf16.xpose.msra.mxu0 0
    %78 = vmatpush.bf16.xpose.msra.mxu0 0
    %79 = vmatpush.bf16.xpose.msra.mxu0 0
    %80 = vmatpush.bf16.xpose.msra.mxu0 0
    %81 = vmatpush.bf16.xpose.msra.mxu0 0
    %82 = vmatpush.bf16.xpose.msra.mxu0 %v73
    %83 = vmatmul.bf16.gmra.mxu0 %v67
    %v84 = vpop.f32.mrf.mxu0
    %v85 = vadd.f32 %v45, %v84
    %v86 = vpop.f32.mrf.mxu0
    %v87 = vadd.f32 %v50, %v86
    %88 = vmatmul.bf16.gmra.mxu0 %v70
    %v89 = vpop.f32.mrf.mxu0
    %v90 = vadd.f32 %v55, %v89
    %v91 = vpop.f32.mrf.mxu0
    %92 = vdwg.mxu0
    %v93 = vmax.f32 %v85, 0.0
    %v94 = vmax.f32 %v87, 0.0
    %v95 = vmax.f32 %v90, 0.0
    %v96 = vld [vmem:[%s3] sm:$0xf]
    %v97 = vld [vmem:[%s3 + $0x4] sm:$0xf]
    %v98 = vld [vmem:[%s3 + $0x8] sm:$0xf]
    %v99 = vld [vmem:[%s3 + $0xc] sm:$0xf]
    %v100 = vld [vmem:[%s3 + $0x10] sm:$0xf]
    %v101 = vld [vmem:[%s3 + $0x14] sm:$0xf]
    %v102 = vld [vmem:[%s3 + $0x18] sm:$0x7]
    %v103 = vpack.c.bf16 %v94, %v93
    %v104 = vpack.c.bf16 %v95, %v95
    %v105 = vld [vmem:[%s4] sm:$0xff]
    %v106 = vld [vmem:[%s4 + $0x8] sm:$0xff]
    %v107 = vld [vmem:[%s4 + $0x10] sm:$0xff]
    %v108 = vld [vmem:[%s4 + $0x18] sm:$0xff]
    %v109 = vld [vmem:[%s4 + $0x20] sm:$0xff]
    %v110 = vld [vmem:[%s4 + $0x28] sm:$0xff]
    %v111 = vld [vmem:[%s4 + $0x30] sm:$0x3f]
    %113 = vset.pattern.permute.xlu0 0
    %114 = vperm.xlu0 %113, %v105
    %v115 = vpop.permute.xlu0 %114
    %118 = vset.pattern.permute.xlu0 0
    %119 = vperm.xlu0 %118, %v106
    %v120 = vpop.permute.xlu0 %119
    %123 = vset.pattern.permute.xlu0 0
    %124 = vperm.xlu0 %123, %v107
    %v125 = vpop.permute.xlu0 %124
    %128 = vset.pattern.permute.xlu0 0
    %129 = vperm.xlu0 %128, %v108
    %v130 = vpop.permute.xlu0 %129
    %133 = vset.pattern.permute.xlu0 0
    %134 = vperm.xlu0 %133, %v109
    %v135 = vpop.permute.xlu0 %134
    %138 = vset.pattern.permute.xlu0 0
    %139 = vperm.xlu0 %138, %v110
    %v140 = vpop.permute.xlu0 %139
    %143 = vset.pattern.permute.xlu0 0
    %144 = vperm.xlu0 %143, %v111
    %v145 = vpop.permute.xlu0 %144
    %v154 = vunpack.c.l.b16 %v96
    %v155 = vunpack.c.l.b16 %v97
    %v156 = vunpack.c.l.b16 %v98
    %v157 = vunpack.c.l.b16 %v99
    %v158 = vunpack.c.l.b16 %v100
    %v159 = vunpack.c.l.b16 %v101
    %v160 = vunpack.c.l.b16 %v102
    %v161 = vpack.c.b16 %v155, %v154
    %v162 = vpack.c.b16 %v157, %v156
    %v163 = vpack.c.b16 %v159, %v158
    %v164 = vpack.c.b16 %v160, %v160
    %vm165 = vcmask 146432
    %v167 = vsel %vm165, %v161, 0
    %v170 = vsel %vm165, %v162, 0
    %v173 = vsel %vm165, %v163, 0
    %v176 = vsel %vm165, %v164, 0
    %vm178 = vcmask 1040384
    %v180 = vsel %vm178, %v104, 0
    %182 = vmatpush.bf16.msra.mxu0 0
    %183 = vmatpush.bf16.msra.mxu0 0
    %184 = vmatpush.bf16.msra.mxu0 0
    %185 = vmatpush.bf16.msra.mxu0 0
    %186 = vmatpush.bf16.msra.mxu0 0
    %187 = vmatpush.bf16.msra.mxu0 0
    %188 = vmatpush.bf16.msra.mxu0 %v180
    %189 = vmatpush.bf16.msra.mxu0 %v103
    %190 = vmatmul.bf16.gmra.mxu0 %v167
    %v191 = vpop.f32.mrf.mxu0
    %v192 = vadd.f32 %v115, %v191
    %v193 = vpop.f32.mrf.mxu0
    %v194 = vadd.f32 %v120, %v193
    %195 = vmatmul.bf16.gmra.mxu0 %v170
    %v196 = vpop.f32.mrf.mxu0
    %v197 = vadd.f32 %v125, %v196
    %v198 = vpop.f32.mrf.mxu0
    %v199 = vadd.f32 %v130, %v198
    %200 = vmatmul.bf16.gmra.mxu0 %v173
    %v201 = vpop.f32.mrf.mxu0
    %v202 = vadd.f32 %v135, %v201
    %v203 = vpop.f32.mrf.mxu0
    %v204 = vadd.f32 %v140, %v203
    %205 = vmatmul.bf16.gmra.mxu0 %v176
    %v206 = vpop.f32.mrf.mxu0
    %v207 = vadd.f32 %v145, %v206
    %v208 = vpop.f32.mrf.mxu0
    %209 = vdwg.mxu0
    %v210 = vmax.f32 %v192, 0.0
    %v211 = vmax.f32 %v194, 0.0
    %v212 = vmax.f32 %v197, 0.0
    %v213 = vmax.f32 %v199, 0.0
    %v214 = vmax.f32 %v202, 0.0
    %v215 = vmax.f32 %v204, 0.0
    %v216 = vmax.f32 %v207, 0.0
    %v217 = vld [vmem:[%s5] sm:$0xf]
    %v218 = vld [vmem:[%s5 + $0x4] sm:$0x3]
    %v219 = vpack.c.bf16 %v211, %v210
    %v220 = vpack.c.bf16 %v213, %v212
    %v221 = vpack.c.bf16 %v215, %v214
    %v222 = vpack.c.bf16 %v216, %v216
    %v223 = vld [vmem:[%s6] sm:$0xff]
    %v224 = vld [vmem:[%s6 + $0x8] sm:$0xf]
    %226 = vset.pattern.permute.xlu0 0
    %227 = vperm.xlu0 %226, %v223
    %v228 = vpop.permute.xlu0 %227
    %231 = vset.pattern.permute.xlu0 0
    %232 = vperm.xlu0 %231, %v224
    %v233 = vpop.permute.xlu0 %232
    %v237 = vunpack.c.l.b16 %v217
    %v238 = vunpack.c.l.b16 %v218
    %v239 = vpack.c.b16 %v238, %v237
    %vm240 = vcmask 441344
    %v242 = vsel %vm240, %v239, 0
    %vm244 = vcmask 1042432
    %v246 = vsel %vm244, %v222, 0
    %248 = vmatpush.bf16.msra.mxu0 0
    %249 = vmatpush.bf16.msra.mxu0 0
    %250 = vmatpush.bf16.msra.mxu0 0
    %251 = vmatpush.bf16.msra.mxu0 0
    %252 = vmatpush.bf16.msra.mxu0 %v246
    %253 = vmatpush.bf16.msra.mxu0 %v221
    %254 = vmatpush.bf16.msra.mxu0 %v220
    %255 = vmatpush.bf16.msra.mxu0 %v219
    %256 = vmatmul.bf16.gmra.mxu0 %v242
    %v257 = vpop.f32.mrf.mxu0
    %v258 = vadd.f32 %v228, %v257
    %v259 = vpop.f32.mrf.mxu0
    %v260 = vadd.f32 %v233, %v259
    %261 = vdwg.mxu0
    %v262 = vmax.f32 %v258, 0.0
    %v263 = vmax.f32 %v260, 0.0
    %v264 = vld [vmem:[%s7] sm:$0x3]
    %v265 = vpack.c.bf16 %v263, %v262
    %v266 = vld [vmem:[%s8] sm:$0xf]
    %268 = vset.pattern.permute.xlu0 0
    %269 = vperm.xlu0 %268, %v266
    %v270 = vpop.permute.xlu0 %269
    %vm272 = vcmask 97280
    %v274 = vsel %vm272, %v264, 0
    %vm276 = vcmask 1045504
    %v278 = vsel %vm276, %v265, 0
    %280 = vmatpush.bf16.msra.mxu0 0
    %281 = vmatpush.bf16.msra.mxu0 0
    %282 = vmatpush.bf16.msra.mxu0 0
    %283 = vmatpush.bf16.msra.mxu0 0
    %284 = vmatpush.bf16.msra.mxu0 0
    %285 = vmatpush.bf16.msra.mxu0 0
    %286 = vmatpush.bf16.msra.mxu0 0
    %287 = vmatpush.bf16.msra.mxu0 %v278
    %288 = vmatmul.bf16.gmra.mxu0 %v274
    %v289 = vpop.f32.mrf.mxu0
    %v290 = vadd.f32 %v270, %v289
    %v291 = vpop.f32.mrf.mxu0
    %292 = vdwg.mxu0
    %vm293 = vcmask 60416
    %v294 = vsel %vm293, %v290, -inf
    %v295 = vrot.slane %v294, 4
    %v296 = vmax.f32 %v294, %v295
    %v297 = vrot.slane %v296, 2
    %v298 = vmax.f32 %v296, %v297
    %v299 = vrot.slane %v298, 1
    %v300 = vmax.f32 %v298, %v299
    %v301 = vsub.f32 %v290, %v300
    %v302 = vmul.f32 %v301, 1.442695
    %v303 = vpow.pop %v302
    %v304 = vsel %vm293, %v303, 0.0
    %v305 = vrot.slane %v304, 4
    %v306 = vadd.f32 %v304, %v305
    %v307 = vrot.slane %v306, 2
    %v308 = vadd.f32 %v306, %v307
    %v309 = vrot.slane %v308, 1
    %v310 = vadd.f32 %v308, %v309
    %v311 = vrcp.pop %v310
    %v312 = vmul.f32 %v310, %v311
    %v313 = vsub.f32 1.0, %v312
    %v314 = vmul.f32 %v311, %v313
    %v315 = vadd.f32 %v311, %v314
    %vm316 = vweird.f32 %v310
    %vm317 = vweird.f32 %v311
    %vm318 = vmor %vm316, %vm317
    %v319 = vsel %vm318, %v311, %v315
    %v320 = vand.u32 2147483647, %v310
    %vm321 = vcmp.eq.f32.partialorder %v320, 8.507059e+37
    %v322 = vand.u32 %v310, 2147483648
    %v323 = vor.u32 1.1754944e-38, %v322
    %v324 = vsel %vm321, %v323, %v319
    %v325 = vmul.f32 %v303, %v324
    %326 = vst.msk [vmem:[#allocation2] sm:$0xf] %vm293, %v325
    // Predicated region
    $region38: #{tpu_custom_call.1} parent=1 // pred_check
      _
    $region39: #{tpu_custom_call.1} parent=1 // pred_check_branch
      %328 = sbr.rel (0) target = $region41
    $region40: #{tpu_custom_call.1} parent=1 // pred_region
      %330 = vsyncadd [#allocation3], 0
      %s332 = sshll.u32 [#allocation2], 4
      %s333 = int_to_ptr.vmem [resolvable:$true] %s332
      %s334 = sshll.u32 %s9, 4
      %s335 = int_to_ptr.hbm [resolvable:$true] %s334
      %337 = dma.vmem_to_hbm [thread:$0]  %s333, 64, %s335, [#allocation3]
    $region41: #{tpu_custom_call.1} parent=1 // pred_fallthru
      _
    // Predicated region
    $region42: #{tpu_custom_call.1} parent=1 // pred_check
      _
    $region43: #{tpu_custom_call.1} parent=1 // pred_check_branch
      %339 = sbr.rel (0) target = $region45
    $region44: #{tpu_custom_call.1} parent=1 // pred_region
      %341 = dma.done [#allocation3], 64
    $region45: #{tpu_custom_call.1} parent=1 // pred_fallthru
      _
    %342 = vsyncpa [#allocation3], 1

</llo_original>
